<compile_context>
chip_gen: v5e
topology: v5e:2x2
jax: 0.10.0
libtpu: 0.0.40
codegen_flags: <defaults>
</compile_context>

<pallas_src>
import jax
import jax.numpy as jnp
from jax.experimental import pallas as pl
from jax.experimental.pallas import tpu as pltpu

D_HID = 128   # encoder/decoder hidden width (already lane-aligned)
D_LAT = 32    # latent width (zero-padded to 128 inside the wrapper)


def _round_up(x, m):
    return (x + m - 1) // m * m


def _make_kernel(block_m, d_pad, batch, d_in):
    """Fused autoencoder forward for one [block_m, d_pad] batch tile."""

    def kernel(x_ref, w1_ref, b1_ref, w2_ref, b2_ref, w3_ref, b3_ref,
               w4_ref, b4_ref, out_ref, loss_ref):
        io_dt = x_ref.dtype
        x = x_ref[...]                                                  # [bm, Dp]

        # Encoder: D -> 128 (ReLU) -> 128-padded latent.
        h1 = jnp.dot(x, w1_ref[...],
                     preferred_element_type=jnp.float32) + b1_ref[...]
        h1 = jnp.maximum(h1, 0.0)

        z = jnp.dot(h1.astype(io_dt), w2_ref[...],
                    preferred_element_type=jnp.float32) + b2_ref[...]

        # Decoder: latent -> 128 (ReLU) -> D logits -> sigmoid.
        d1 = jnp.dot(z.astype(io_dt), w3_ref[...],
                     preferred_element_type=jnp.float32) + b3_ref[...]
        d1 = jnp.maximum(d1, 0.0)

        dec2 = jnp.dot(d1.astype(io_dt), w4_ref[...],
                       preferred_element_type=jnp.float32) + b4_ref[...]
        out = jax.nn.sigmoid(dec2)                                      # f32

        # dec2 is intentionally NOT written back to HBM (Net discards it).
        out_ref[...] = out.astype(out_ref.dtype)

        # Per-block partial SSE in f32, masked so zero-padded rows/columns do
        # not contribute. Final mean happens in the wrapper.
        pid = pl.program_id(0)
        row_ids = jax.lax.broadcasted_iota(jnp.int32, (block_m, 1), 0) \
            + pid * block_m
        col_ids = jax.lax.broadcasted_iota(jnp.int32, (1, d_pad), 1)
        valid = (row_ids < batch) & (col_ids < d_in)
        diff = out - x.astype(jnp.float32)
        sse = jnp.sum(jnp.where(valid, diff * diff, 0.0))
        loss_ref[...] = jnp.broadcast_to(sse, (1, 1, 128))

    return kernel


def net_forward(x_nchw, params, *, block_m=256, io_dtype=jnp.float32):
    """Equivalent of Net.forward: returns (out, loss_bar).

    block_m: batch tile (use 128 on v5e, 256 on v6e/v7x; auto-shrinks for tiny B).
    io_dtype: HBM dtype for x / weights / out (use jnp.bfloat16 on v6e/v7x).
    """
    B, C, H, W = x_nchw.shape
    D = C * H * W
    w1, b1, w2, b2, w3, b3, w4, b4 = params
    d_hid = w1.shape[1]          # must be a multiple of 128 (128 here)
    d_lat = w2.shape[1]

    # Lane-align feature / latent dims; tile the batch dimension.
    d_pad = _round_up(D, 128)
    lat_pad = _round_up(d_lat, 128)
    bm = min(block_m, _round_up(B, 8))
    b_pad = _round_up(B, bm)
    nb = b_pad // bm

    x_flat = x_nchw.reshape(B, D)
    x_p = jnp.zeros((b_pad, d_pad), io_dtype).at[:B, :D].set(
        x_flat.astype(io_dtype))

    def pad2(a, rows, cols):
        return jnp.zeros((rows, cols), a.dtype).at[:a.shape[0], :a.shape[1]].set(a)

    # Weights in io_dtype (bf16 halves DMA bytes on v6e/v7x); biases stay f32.
    w1_p = pad2(w1, d_pad, d_hid).astype(io_dtype)
    b1_p = b1.astype(jnp.float32)
    w2_p = pad2(w2, d_hid, lat_pad).astype(io_dtype)
    b2_p = pad2(b2, 1, lat_pad).astype(jnp.float32)
    w3_p = pad2(w3, lat_pad, d_hid).astype(io_dtype)
    b3_p = b3.astype(jnp.float32)
    w4_p = pad2(w4, d_hid, d_pad).astype(io_dtype)
    b4_p = pad2(b4, 1, d_pad).astype(jnp.float32)

    resident = lambda i: (0, 0)   # weights/biases stay VMEM-resident across steps

    out_p, loss_parts = pl.pallas_call(
        _make_kernel(bm, d_pad, B, D),
        grid=(nb,),
        in_specs=[
            pl.BlockSpec((bm, d_pad), lambda i: (i, 0)),      # x tile
            pl.BlockSpec((d_pad, d_hid), resident),           # w1
            pl.BlockSpec((1, d_hid), resident),               # b1
            pl.BlockSpec((d_hid, lat_pad), resident),         # w2
            pl.BlockSpec((1, lat_pad), resident),             # b2
            pl.BlockSpec((lat_pad, d_hid), resident),         # w3
            pl.BlockSpec((1, d_hid), resident),               # b3
            pl.BlockSpec((d_hid, d_pad), resident),           # w4
            pl.BlockSpec((1, d_pad), resident),               # b4
        ],
        out_specs=(
            pl.BlockSpec((bm, d_pad), lambda i: (i, 0)),      # reconstruction
            pl.BlockSpec((1, 1, 128), lambda i: (i, 0, 0)),   # per-block SSE
        ),
        out_shape=(
            jax.ShapeDtypeStruct((b_pad, d_pad), io_dtype),
            jax.ShapeDtypeStruct((nb, 1, 128), jnp.float32),
        ),
        compiler_params=pltpu.CompilerParams(
            dimension_semantics=("parallel",)),               # v7x dual-TC sharding
    )(x_p, w1_p, b1_p, w2_p, b2_p, w3_p, b3_p, w4_p, b4_p)

    out = out_p[:B, :D].astype(x_nchw.dtype).reshape(B, C, H, W)
    loss_bar = jnp.sum(loss_parts[:, 0, 0]) / jnp.float32(B * D)
    return out, loss_bar


def init_params(key, d_in, d_hid=D_HID, d_lat=D_LAT):
    """Deterministic synthetic parameters (fan-in scaled normals, zero biases)."""
    k1, k2, k3, k4 = jax.random.split(key, 4)

    def linear(k, fan_in, fan_out):
        w = jax.random.normal(k, (fan_in, fan_out), jnp.float32) / jnp.sqrt(
            jnp.asarray(fan_in, jnp.float32))
        b = jnp.zeros((1, fan_out), jnp.float32)
        return w, b

    w1, b1 = linear(k1, d_in, d_hid)    # encoder fc1
    w2, b2 = linear(k2, d_hid, d_lat)   # encoder fc2 (latent)
    w3, b3 = linear(k3, d_lat, d_hid)   # decoder fc1
    w4, b4 = linear(k4, d_hid, d_in)    # decoder fc2 (dec2 logits)
    return (w1, b1, w2, b2, w3, b3, w4, b4)


if __name__ == "__main__":
    key = jax.random.PRNGKey(0)
    kx, kp = jax.random.split(key)

    # MNIST-shaped input: batch=2, channels=1, spatial=28x28 -> D=784
    # (exercises the lane-padding path: 784 -> 896).
    B, C, H, W = 2, 1, 28, 28
    x = jax.random.normal(kx, (B, C, H, W), dtype=jnp.float32)
    params = init_params(kp, C * H * W)

    out, loss_bar = jax.jit(net_forward)(x, params)
    jax.block_until_ready((out, loss_bar))

    assert out.shape == (B, C, H, W)
    assert loss_bar.shape == ()
    assert bool(jnp.isfinite(loss_bar))
    print("KERNEL_OK")
</pallas_src>

<mosaic_0001>
module attributes {stable_mosaic.version = 11 : i64} {
  func.func @kernel(%arg0: i32, %arg1: memref<8x896xf32, #tpu.memory_space<vmem>>, %arg2: memref<896x128xf32, #tpu.memory_space<vmem>>, %arg3: memref<1x128xf32, #tpu.memory_space<vmem>>, %arg4: memref<128x128xf32, #tpu.memory_space<vmem>>, %arg5: memref<1x128xf32, #tpu.memory_space<vmem>>, %arg6: memref<128x128xf32, #tpu.memory_space<vmem>>, %arg7: memref<1x128xf32, #tpu.memory_space<vmem>>, %arg8: memref<128x896xf32, #tpu.memory_space<vmem>>, %arg9: memref<1x896xf32, #tpu.memory_space<vmem>>, %arg10: memref<8x896xf32, #tpu.memory_space<vmem>>, %arg11: memref<1x1x128xf32, #tpu.memory_space<vmem>>) attributes {dimension_semantics = [#tpu.dimension_semantics<parallel>], iteration_bounds = array<i64: 1>, scalar_prefetch = 0 : i64, scratch_operands = 0 : i64, tpu.core_type = #tpu.core_type<tc>, window_params = [{transform_indices = @transform_0, window_bounds = array<i64: 8, 896>}, {pipeline_mode = #tpu.pipeline_mode<synchronous>, transform_indices = @transform_1, window_bounds = array<i64: 896, 128>}, {pipeline_mode = #tpu.pipeline_mode<synchronous>, transform_indices = @transform_2, window_bounds = array<i64: 1, 128>}, {pipeline_mode = #tpu.pipeline_mode<synchronous>, transform_indices = @transform_3, window_bounds = array<i64: 128, 128>}, {pipeline_mode = #tpu.pipeline_mode<synchronous>, transform_indices = @transform_4, window_bounds = array<i64: 1, 128>}, {pipeline_mode = #tpu.pipeline_mode<synchronous>, transform_indices = @transform_5, window_bounds = array<i64: 128, 128>}, {pipeline_mode = #tpu.pipeline_mode<synchronous>, transform_indices = @transform_6, window_bounds = array<i64: 1, 128>}, {pipeline_mode = #tpu.pipeline_mode<synchronous>, transform_indices = @transform_7, window_bounds = array<i64: 128, 896>}, {pipeline_mode = #tpu.pipeline_mode<synchronous>, transform_indices = @transform_8, window_bounds = array<i64: 1, 896>}, {transform_indices = @transform_9, window_bounds = array<i64: 8, 896>}, {transform_indices = @transform_10, window_bounds = array<i64: 1, 1, 128>}]} {
    %c0 = arith.constant 0 : index
    %c0_0 = arith.constant 0 : index
    %0 = vector.load %arg1[%c0, %c0_0] : memref<8x896xf32, #tpu.memory_space<vmem>>, vector<8x896xf32>
    %c0_1 = arith.constant 0 : index
    %c0_2 = arith.constant 0 : index
    %1 = vector.load %arg2[%c0_1, %c0_2] : memref<896x128xf32, #tpu.memory_space<vmem>>, vector<896x128xf32>
    %cst = arith.constant dense<0.000000e+00> : vector<8x128xf32>
    %2 = tpu.matmul %0, %1, %cst {dimension_numbers = #tpu.dot_dimension_numbers<[1], [0], [0], [1], [0, 0, 1, 1], [], []>} : vector<8x896xf32>, vector<896x128xf32>, vector<8x128xf32> -> vector<8x128xf32>
    %c0_3 = arith.constant 0 : index
    %c0_4 = arith.constant 0 : index
    %3 = vector.load %arg3[%c0_3, %c0_4] : memref<1x128xf32, #tpu.memory_space<vmem>>, vector<1x128xf32>
    %4 = vector.broadcast %3 : vector<1x128xf32> to vector<8x128xf32>
    %5 = arith.addf %2, %4 : vector<8x128xf32>
    %cst_5 = arith.constant 0.000000e+00 : f32
    %6 = vector.broadcast %cst_5 : f32 to vector<8x128xf32>
    %7 = arith.maximumf %5, %6 : vector<8x128xf32>
    %c0_6 = arith.constant 0 : index
    %c0_7 = arith.constant 0 : index
    %8 = vector.load %arg4[%c0_6, %c0_7] : memref<128x128xf32, #tpu.memory_space<vmem>>, vector<128x128xf32>
    %cst_8 = arith.constant dense<0.000000e+00> : vector<8x128xf32>
    %9 = tpu.matmul %7, %8, %cst_8 {dimension_numbers = #tpu.dot_dimension_numbers<[1], [0], [0], [1], [0, 0, 1, 1], [], []>} : vector<8x128xf32>, vector<128x128xf32>, vector<8x128xf32> -> vector<8x128xf32>
    %c0_9 = arith.constant 0 : index
    %c0_10 = arith.constant 0 : index
    %10 = vector.load %arg5[%c0_9, %c0_10] : memref<1x128xf32, #tpu.memory_space<vmem>>, vector<1x128xf32>
    %11 = vector.broadcast %10 : vector<1x128xf32> to vector<8x128xf32>
    %12 = arith.addf %9, %11 : vector<8x128xf32>
    %c0_11 = arith.constant 0 : index
    %c0_12 = arith.constant 0 : index
    %13 = vector.load %arg6[%c0_11, %c0_12] : memref<128x128xf32, #tpu.memory_space<vmem>>, vector<128x128xf32>
    %cst_13 = arith.constant dense<0.000000e+00> : vector<8x128xf32>
    %14 = tpu.matmul %12, %13, %cst_13 {dimension_numbers = #tpu.dot_dimension_numbers<[1], [0], [0], [1], [0, 0, 1, 1], [], []>} : vector<8x128xf32>, vector<128x128xf32>, vector<8x128xf32> -> vector<8x128xf32>
    %c0_14 = arith.constant 0 : index
    %c0_15 = arith.constant 0 : index
    %15 = vector.load %arg7[%c0_14, %c0_15] : memref<1x128xf32, #tpu.memory_space<vmem>>, vector<1x128xf32>
    %16 = vector.broadcast %15 : vector<1x128xf32> to vector<8x128xf32>
    %17 = arith.addf %14, %16 : vector<8x128xf32>
    %cst_16 = arith.constant 0.000000e+00 : f32
    %18 = vector.broadcast %cst_16 : f32 to vector<8x128xf32>
    %19 = arith.maximumf %17, %18 : vector<8x128xf32>
    %c0_17 = arith.constant 0 : index
    %c0_18 = arith.constant 0 : index
    %20 = vector.load %arg8[%c0_17, %c0_18] : memref<128x896xf32, #tpu.memory_space<vmem>>, vector<128x896xf32>
    %cst_19 = arith.constant dense<0.000000e+00> : vector<8x896xf32>
    %21 = tpu.matmul %19, %20, %cst_19 {dimension_numbers = #tpu.dot_dimension_numbers<[1], [0], [0], [1], [0, 0, 1, 1], [], []>} : vector<8x128xf32>, vector<128x896xf32>, vector<8x896xf32> -> vector<8x896xf32>
    %c0_20 = arith.constant 0 : index
    %c0_21 = arith.constant 0 : index
    %22 = vector.load %arg9[%c0_20, %c0_21] : memref<1x896xf32, #tpu.memory_space<vmem>>, vector<1x896xf32>
    %23 = vector.broadcast %22 : vector<1x896xf32> to vector<8x896xf32>
    %24 = arith.addf %21, %23 : vector<8x896xf32>
    %25 = arith.negf %24 : vector<8x896xf32>
    %26 = math.exp %25 : vector<8x896xf32>
    %cst_22 = arith.constant 1.000000e+00 : f32
    %27 = vector.broadcast %cst_22 : f32 to vector<8x896xf32>
    %28 = arith.addf %27, %26 : vector<8x896xf32>
    %29 = arith.divf %27, %28 : vector<8x896xf32>
    %c0_23 = arith.constant 0 : index
    %c0_24 = arith.constant 0 : index
    %30 = vector.load %arg10[%c0_23, %c0_24] : memref<8x896xf32, #tpu.memory_space<vmem>>, vector<8x896xf32>
    tpu.vector_store %arg10[%c0_23, %c0_24], %29 {strides = array<i32>} : memref<8x896xf32, #tpu.memory_space<vmem>>, vector<8x896xf32>,
    %31 = tpu.iota {dimensions = array<i32: 0>} : vector<8x1xi32>
    %c8_i32 = arith.constant 8 : i32
    %32 = arith.muli %arg0, %c8_i32 : i32
    %33 = vector.broadcast %32 : i32 to vector<8x1xi32>
    %34 = arith.addi %31, %33 : vector<8x1xi32>
    %35 = tpu.iota {dimensions = array<i32: 1>} : vector<1x896xi32>
    %c2_i32 = arith.constant 2 : i32
    %36 = vector.broadcast %c2_i32 : i32 to vector<8x1xi32>
    %37 = arith.cmpi slt, %34, %36 : vector<8x1xi32>
    %c784_i32 = arith.constant 784 : i32
    %38 = vector.broadcast %c784_i32 : i32 to vector<1x896xi32>
    %39 = arith.cmpi slt, %35, %38 : vector<1x896xi32>
    %40 = vector.broadcast %37 : vector<8x1xi1> to vector<8x896xi1>
    %41 = vector.broadcast %39 : vector<1x896xi1> to vector<8x896xi1>
    %42 = arith.andi %40, %41 : vector<8x896xi1>
    %43 = arith.subf %29, %0 : vector<8x896xf32>
    %44 = arith.mulf %43, %43 : vector<8x896xf32>
    %cst_25 = arith.constant 0.000000e+00 : f32
    %45 = vector.broadcast %cst_25 : f32 to vector<8x896xf32>
    %46 = arith.select %42, %44, %45 : vector<8x896xi1>, vector<8x896xf32>
    %47 = vector.shape_cast %46 : vector<8x896xf32> to vector<1x8x896xf32>
    %cst_26 = arith.constant dense<0.000000e+00> : vector<1xf32>
    %48 = vector.multi_reduction <add>, %47, %cst_26 [1, 2] : vector<1x8x896xf32> to vector<1xf32>
    %49 = vector.shape_cast %48 : vector<1xf32> to vector<1x1x1xf32>
    %50 = vector.extract %49[0, 0, 0] : f32 from vector<1x1x1xf32>
    %51 = vector.broadcast %50 : f32 to vector<1x1x128xf32>
    %c0_27 = arith.constant 0 : index
    %c0_28 = arith.constant 0 : index
    %c0_29 = arith.constant 0 : index
    %52 = vector.load %arg11[%c0_27, %c0_28, %c0_29] : memref<1x1x128xf32, #tpu.memory_space<vmem>>, vector<1x1x128xf32>
    tpu.vector_store %arg11[%c0_27, %c0_28, %c0_29], %51 {strides = array<i32>} : memref<1x1x128xf32, #tpu.memory_space<vmem>>, vector<1x1x128xf32>,
    return
  }
  func.func @transform_0(%arg0: i32) -> (i32, i32) {
    %c0_i32 = arith.constant 0 : i32
    %c0_i32_0 = arith.constant 0 : i32
    return %arg0, %c0_i32 : i32, i32
  }
  func.func @transform_1(%arg0: i32) -> (i32, i32) {
    %c0_i32 = arith.constant 0 : i32
    %c0_i32_0 = arith.constant 0 : i32
    %c0_i32_1 = arith.constant 0 : i32
    return %c0_i32, %c0_i32_0 : i32, i32
  }
  func.func @transform_2(%arg0: i32) -> (i32, i32) {
    %c0_i32 = arith.constant 0 : i32
    %c0_i32_0 = arith.constant 0 : i32
    %c0_i32_1 = arith.constant 0 : i32
    return %c0_i32, %c0_i32_0 : i32, i32
  }
  func.func @transform_3(%arg0: i32) -> (i32, i32) {
    %c0_i32 = arith.constant 0 : i32
    %c0_i32_0 = arith.constant 0 : i32
    %c0_i32_1 = arith.constant 0 : i32
    return %c0_i32, %c0_i32_0 : i32, i32
  }
  func.func @transform_4(%arg0: i32) -> (i32, i32) {
    %c0_i32 = arith.constant 0 : i32
    %c0_i32_0 = arith.constant 0 : i32
    %c0_i32_1 = arith.constant 0 : i32
    return %c0_i32, %c0_i32_0 : i32, i32
  }
  func.func @transform_5(%arg0: i32) -> (i32, i32) {
    %c0_i32 = arith.constant 0 : i32
    %c0_i32_0 = arith.constant 0 : i32
    %c0_i32_1 = arith.constant 0 : i32
    return %c0_i32, %c0_i32_0 : i32, i32
  }
  func.func @transform_6(%arg0: i32) -> (i32, i32) {
    %c0_i32 = arith.constant 0 : i32
    %c0_i32_0 = arith.constant 0 : i32
    %c0_i32_1 = arith.constant 0 : i32
    return %c0_i32, %c0_i32_0 : i32, i32
  }
  func.func @transform_7(%arg0: i32) -> (i32, i32) {
    %c0_i32 = arith.constant 0 : i32
    %c0_i32_0 = arith.constant 0 : i32
    %c0_i32_1 = arith.constant 0 : i32
    return %c0_i32, %c0_i32_0 : i32, i32
  }
  func.func @transform_8(%arg0: i32) -> (i32, i32) {
    %c0_i32 = arith.constant 0 : i32
    %c0_i32_0 = arith.constant 0 : i32
    %c0_i32_1 = arith.constant 0 : i32
    return %c0_i32, %c0_i32_0 : i32, i32
  }
  func.func @transform_9(%arg0: i32) -> (i32, i32) {
    %c0_i32 = arith.constant 0 : i32
    %c0_i32_0 = arith.constant 0 : i32
    return %arg0, %c0_i32 : i32, i32
  }
  func.func @transform_10(%arg0: i32) -> (i32, i32, i32) {
    %c0_i32 = arith.constant 0 : i32
    %c0_i32_0 = arith.constant 0 : i32
    %c0_i32_1 = arith.constant 0 : i32
    return %arg0, %c0_i32, %c0_i32_0 : i32, i32, i32
  }
}

</mosaic_0001>

<llo_original>
// kernel: net_forward.1
$region0: #{net_forward.1}
  #allocation0 [shape = 'u32[]', space=smem, size = 0x4, offset = 0x4, fixed_abs, tag = 'smem constant byte address 0x4 - core index']
  #allocation1 [shape = 'u32[72,128]{1,0:T(1,128)}', space=vmem, size = 0x9000, scoped, tag = 'internal scratch']
  %s0 = inlined_call_operand.vmem [shape: f32[8,896], index: 0, kind: input, shape index: {}]
  %s1 = inlined_call_operand.vmem [shape: f32[896,128], index: 1, kind: input, shape index: {}]
  %s2 = inlined_call_operand.vmem [shape: f32[1,128], index: 2, kind: input, shape index: {}]
  %s3 = inlined_call_operand.vmem [shape: f32[128,128], index: 3, kind: input, shape index: {}]
  %s4 = inlined_call_operand.vmem [shape: f32[1,128], index: 4, kind: input, shape index: {}]
  %s5 = inlined_call_operand.vmem [shape: f32[128,128], index: 5, kind: input, shape index: {}]
  %s6 = inlined_call_operand.vmem [shape: f32[1,128], index: 6, kind: input, shape index: {}]
  %s7 = inlined_call_operand.vmem [shape: f32[128,896], index: 7, kind: input, shape index: {}]
  %s8 = inlined_call_operand.vmem [shape: f32[1,896], index: 8, kind: input, shape index: {}]
  %s9 = inlined_call_operand.vmem [shape: f32[8,896], index: 9, kind: output, shape index: {0}]
  %s10 = inlined_call_operand.vmem [shape: f32[1,1,128], index: 10, kind: output, shape index: {1}]
  %11 = xla_tuple %s9, %s10
  %s12 = sld [smem:[#allocation0]]
  $region54: #{net_forward.1} parent=0
    _
  %s14 = ssub.s32 1, %s12
  %s15 = scalar_select 0, %s14, %s12
  // Predicated region
  $region2: #{net_forward.1} parent=0 // pred_check
    _
  $region3: #{net_forward.1} parent=0 // pred_check_branch
    %17 = sbr.rel (0) target = $region5
  $region4: #{net_forward.1} parent=0 // pred_region
    _
  $region5: #{net_forward.1} parent=0 // pred_fallthru
    _
  // Predicated region
  $region6: #{net_forward.1} parent=0 // pred_check
    _
  $region7: #{net_forward.1} parent=0 // pred_check_branch
    %19 = sbr.rel (0) target = $region9
  $region8: #{net_forward.1} parent=0 // pred_region
    _
  $region9: #{net_forward.1} parent=0 // pred_fallthru
    _
  // Predicated region
  $region10: #{net_forward.1} parent=0 // pred_check
    _
  $region11: #{net_forward.1} parent=0 // pred_check_branch
    %21 = sbr.rel (0) target = $region13
  $region12: #{net_forward.1} parent=0 // pred_region
    _
  $region13: #{net_forward.1} parent=0 // pred_fallthru
    _
  // Predicated region
  $region14: #{net_forward.1} parent=0 // pred_check
    _
  $region15: #{net_forward.1} parent=0 // pred_check_branch
    %23 = sbr.rel (0) target = $region17
  $region16: #{net_forward.1} parent=0 // pred_region
    _
  $region17: #{net_forward.1} parent=0 // pred_fallthru
    _
  // Predicated region
  $region18: #{net_forward.1} parent=0 // pred_check
    _
  $region19: #{net_forward.1} parent=0 // pred_check_branch
    %25 = sbr.rel (0) target = $region21
  $region20: #{net_forward.1} parent=0 // pred_region
    _
  $region21: #{net_forward.1} parent=0 // pred_fallthru
    _
  // Predicated region
  $region22: #{net_forward.1} parent=0 // pred_check
    _
  $region23: #{net_forward.1} parent=0 // pred_check_branch
    %27 = sbr.rel (0) target = $region25
  $region24: #{net_forward.1} parent=0 // pred_region
    _
  $region25: #{net_forward.1} parent=0 // pred_fallthru
    _
  // Predicated region
  $region26: #{net_forward.1} parent=0 // pred_check
    _
  $region27: #{net_forward.1} parent=0 // pred_check_branch
    %29 = sbr.rel (0) target = $region29
  $region28: #{net_forward.1} parent=0 // pred_region
    _
  $region29: #{net_forward.1} parent=0 // pred_fallthru
    _
  // Predicated region
  $region30: #{net_forward.1} parent=0 // pred_check
    _
  $region31: #{net_forward.1} parent=0 // pred_check_branch
    %31 = sbr.rel (0) target = $region33
  $region32: #{net_forward.1} parent=0 // pred_region
    _
  $region33: #{net_forward.1} parent=0 // pred_fallthru
    _
  // Predicated region
  $region34: #{net_forward.1} parent=0 // pred_check
    _
  $region35: #{net_forward.1} parent=0 // pred_check_branch
    %33 = sbr.rel (0) target = $region37
  $region36: #{net_forward.1} parent=0 // pred_region
    _
  $region37: #{net_forward.1} parent=0 // pred_fallthru
    _
  %v34 = vld [vmem:[%s0] sm:$0xff]
  %v35 = vld [vmem:[%s0 + $0x8] sm:$0xff]
  %v36 = vld [vmem:[%s0 + $0x10] sm:$0xff]
  %v37 = vld [vmem:[%s0 + $0x18] sm:$0xff]
  %v38 = vld [vmem:[%s0 + $0x20] sm:$0xff]
  %v39 = vld [vmem:[%s0 + $0x28] sm:$0xff]
  %v40 = vld [vmem:[%s0 + $0x30] sm:$0xff]
  %v41 = vld [vmem:[%s1] sm:$0xff]
  %v42 = vld [vmem:[%s1 + $0x8] sm:$0xff]
  %v43 = vld [vmem:[%s1 + $0x10] sm:$0xff]
  %v44 = vld [vmem:[%s1 + $0x18] sm:$0xff]
  %v45 = vld [vmem:[%s1 + $0x20] sm:$0xff]
  %v46 = vld [vmem:[%s1 + $0x28] sm:$0xff]
  %v47 = vld [vmem:[%s1 + $0x30] sm:$0xff]
  %v48 = vld [vmem:[%s1 + $0x38] sm:$0xff]
  %v49 = vld [vmem:[%s1 + $0x40] sm:$0xff]
  %v50 = vld [vmem:[%s1 + $0x48] sm:$0xff]
  %v51 = vld [vmem:[%s1 + $0x50] sm:$0xff]
  %v52 = vld [vmem:[%s1 + $0x58] sm:$0xff]
  %v53 = vld [vmem:[%s1 + $0x60] sm:$0xff]
  %v54 = vld [vmem:[%s1 + $0x68] sm:$0xff]
  %v55 = vld [vmem:[%s1 + $0x70] sm:$0xff]
  %v56 = vld [vmem:[%s1 + $0x78] sm:$0xff]
  %v57 = vld [vmem:[%s1 + $0x80] sm:$0xff]
  %v58 = vld [vmem:[%s1 + $0x88] sm:$0xff]
  %v59 = vld [vmem:[%s1 + $0x90] sm:$0xff]
  %v60 = vld [vmem:[%s1 + $0x98] sm:$0xff]
  %v61 = vld [vmem:[%s1 + $0xa0] sm:$0xff]
  %v62 = vld [vmem:[%s1 + $0xa8] sm:$0xff]
  %v63 = vld [vmem:[%s1 + $0xb0] sm:$0xff]
  %v64 = vld [vmem:[%s1 + $0xb8] sm:$0xff]
  %v65 = vld [vmem:[%s1 + $0xc0] sm:$0xff]
  %v66 = vld [vmem:[%s1 + $0xc8] sm:$0xff]
  %v67 = vld [vmem:[%s1 + $0xd0] sm:$0xff]
  %v68 = vld [vmem:[%s1 + $0xd8] sm:$0xff]
  %v69 = vld [vmem:[%s1 + $0xe0] sm:$0xff]
  %v70 = vld [vmem:[%s1 + $0xe8] sm:$0xff]
  %v71 = vld [vmem:[%s1 + $0xf0] sm:$0xff]
  %v72 = vld [vmem:[%s1 + $0xf8] sm:$0xff]
  %v73 = vld [vmem:[%s1 + $0x100] sm:$0xff]
  %v74 = vld [vmem:[%s1 + $0x108] sm:$0xff]
  %v75 = vld [vmem:[%s1 + $0x110] sm:$0xff]
  %v76 = vld [vmem:[%s1 + $0x118] sm:$0xff]
  %v77 = vld [vmem:[%s1 + $0x120] sm:$0xff]
  %v78 = vld [vmem:[%s1 + $0x128] sm:$0xff]
  %v79 = vld [vmem:[%s1 + $0x130] sm:$0xff]
  %v80 = vld [vmem:[%s1 + $0x138] sm:$0xff]
  %v81 = vld [vmem:[%s1 + $0x140] sm:$0xff]
  %v82 = vld [vmem:[%s1 + $0x148] sm:$0xff]
  %v83 = vld [vmem:[%s1 + $0x150] sm:$0xff]
  %v84 = vld [vmem:[%s1 + $0x158] sm:$0xff]
  %v85 = vld [vmem:[%s1 + $0x160] sm:$0xff]
  %v86 = vld [vmem:[%s1 + $0x168] sm:$0xff]
  %v87 = vld [vmem:[%s1 + $0x170] sm:$0xff]
  %v88 = vld [vmem:[%s1 + $0x178] sm:$0xff]
  %v89 = vld [vmem:[%s1 + $0x180] sm:$0xff]
  %v90 = vld [vmem:[%s1 + $0x188] sm:$0xff]
  %v91 = vld [vmem:[%s1 + $0x190] sm:$0xff]
  %v92 = vld [vmem:[%s1 + $0x198] sm:$0xff]
  %v93 = vld [vmem:[%s1 + $0x1a0] sm:$0xff]
  %v94 = vld [vmem:[%s1 + $0x1a8] sm:$0xff]
  %v95 = vld [vmem:[%s1 + $0x1b0] sm:$0xff]
  %v96 = vld [vmem:[%s1 + $0x1b8] sm:$0xff]
  %v97 = vld [vmem:[%s1 + $0x1c0] sm:$0xff]
  %v98 = vld [vmem:[%s1 + $0x1c8] sm:$0xff]
  %v99 = vld [vmem:[%s1 + $0x1d0] sm:$0xff]
  %v100 = vld [vmem:[%s1 + $0x1d8] sm:$0xff]
  %v101 = vld [vmem:[%s1 + $0x1e0] sm:$0xff]
  %v102 = vld [vmem:[%s1 + $0x1e8] sm:$0xff]
  %v103 = vld [vmem:[%s1 + $0x1f0] sm:$0xff]
  %v104 = vld [vmem:[%s1 + $0x1f8] sm:$0xff]
  %v105 = vld [vmem:[%s1 + $0x200] sm:$0xff]
  %v106 = vld [vmem:[%s1 + $0x208] sm:$0xff]
  %v107 = vld [vmem:[%s1 + $0x210] sm:$0xff]
  %v108 = vld [vmem:[%s1 + $0x218] sm:$0xff]
  %v109 = vld [vmem:[%s1 + $0x220] sm:$0xff]
  %v110 = vld [vmem:[%s1 + $0x228] sm:$0xff]
  %v111 = vld [vmem:[%s1 + $0x230] sm:$0xff]
  %v112 = vld [vmem:[%s1 + $0x238] sm:$0xff]
  %v113 = vld [vmem:[%s1 + $0x240] sm:$0xff]
  %v114 = vld [vmem:[%s1 + $0x248] sm:$0xff]
  %v115 = vld [vmem:[%s1 + $0x250] sm:$0xff]
  %v116 = vld [vmem:[%s1 + $0x258] sm:$0xff]
  %v117 = vld [vmem:[%s1 + $0x260] sm:$0xff]
  %v118 = vld [vmem:[%s1 + $0x268] sm:$0xff]
  %v119 = vld [vmem:[%s1 + $0x270] sm:$0xff]
  %v120 = vld [vmem:[%s1 + $0x278] sm:$0xff]
  %v121 = vld [vmem:[%s1 + $0x280] sm:$0xff]
  %v122 = vld [vmem:[%s1 + $0x288] sm:$0xff]
  %v123 = vld [vmem:[%s1 + $0x290] sm:$0xff]
  %v124 = vld [vmem:[%s1 + $0x298] sm:$0xff]
  %v125 = vld [vmem:[%s1 + $0x2a0] sm:$0xff]
  %v126 = vld [vmem:[%s1 + $0x2a8] sm:$0xff]
  %v127 = vld [vmem:[%s1 + $0x2b0] sm:$0xff]
  %v128 = vld [vmem:[%s1 + $0x2b8] sm:$0xff]
  %v129 = vld [vmem:[%s1 + $0x2c0] sm:$0xff]
  %v130 = vld [vmem:[%s1 + $0x2c8] sm:$0xff]
  %v131 = vld [vmem:[%s1 + $0x2d0] sm:$0xff]
  %v132 = vld [vmem:[%s1 + $0x2d8] sm:$0xff]
  %v133 = vld [vmem:[%s1 + $0x2e0] sm:$0xff]
  %v134 = vld [vmem:[%s1 + $0x2e8] sm:$0xff]
  %v135 = vld [vmem:[%s1 + $0x2f0] sm:$0xff]
  %v136 = vld [vmem:[%s1 + $0x2f8] sm:$0xff]
  %v137 = vld [vmem:[%s1 + $0x300] sm:$0xff]
  %v138 = vld [vmem:[%s1 + $0x308] sm:$0xff]
  %v139 = vld [vmem:[%s1 + $0x310] sm:$0xff]
  %v140 = vld [vmem:[%s1 + $0x318] sm:$0xff]
  %v141 = vld [vmem:[%s1 + $0x320] sm:$0xff]
  %v142 = vld [vmem:[%s1 + $0x328] sm:$0xff]
  %v143 = vld [vmem:[%s1 + $0x330] sm:$0xff]
  %v144 = vld [vmem:[%s1 + $0x338] sm:$0xff]
  %v145 = vld [vmem:[%s1 + $0x340] sm:$0xff]
  %v146 = vld [vmem:[%s1 + $0x348] sm:$0xff]
  %v147 = vld [vmem:[%s1 + $0x350] sm:$0xff]
  %v148 = vld [vmem:[%s1 + $0x358] sm:$0xff]
  %v149 = vld [vmem:[%s1 + $0x360] sm:$0xff]
  %v150 = vld [vmem:[%s1 + $0x368] sm:$0xff]
  %v151 = vld [vmem:[%s1 + $0x370] sm:$0xff]
  %v152 = vld [vmem:[%s1 + $0x378] sm:$0xff]
  %v153 = vld [vmem:[%s2] sm:$0x1]
  %v155 = vperm.slane %v153, 0
  %157 = vmatpush.msra.mxu0 %v56
  %158 = vmatpush.msra.mxu0 %v55
  %159 = vmatpush.msra.mxu0 %v54
  %160 = vmatpush.msra.mxu0 %v53
  %161 = vmatpush.msra.mxu0 %v52
  %162 = vmatpush.msra.mxu0 %v51
  %163 = vmatpush.msra.mxu0 %v50
  %164 = vmatpush.msra.mxu0 %v49
  %165 = vmatpush.msra.mxu0 %v48
  %166 = vmatpush.msra.mxu0 %v47
  %167 = vmatpush.msra.mxu0 %v46
  %168 = vmatpush.msra.mxu0 %v45
  %169 = vmatpush.msra.mxu0 %v44
  %170 = vmatpush.msra.mxu0 %v43
  %171 = vmatpush.msra.mxu0 %v42
  %172 = vmatpush.msra.mxu0 %v41
  %173 = vmatmul.f32.gmra.mxu0 %v34
  %v174 = vpop.f32.mrf.mxu0
  %v175 = vadd.f32 %v155, %v174
  %176 = vdwg.mxu0
  %177 = vmatpush.msra.mxu0 %v72
  %178 = vmatpush.msra.mxu0 %v71
  %179 = vmatpush.msra.mxu0 %v70
  %180 = vmatpush.msra.mxu0 %v69
  %181 = vmatpush.msra.mxu0 %v68
  %182 = vmatpush.msra.mxu0 %v67
  %183 = vmatpush.msra.mxu0 %v66
  %184 = vmatpush.msra.mxu0 %v65
  %185 = vmatpush.msra.mxu0 %v64
  %186 = vmatpush.msra.mxu0 %v63
  %187 = vmatpush.msra.mxu0 %v62
  %188 = vmatpush.msra.mxu0 %v61
  %189 = vmatpush.msra.mxu0 %v60
  %190 = vmatpush.msra.mxu0 %v59
  %191 = vmatpush.msra.mxu0 %v58
  %192 = vmatpush.msra.mxu0 %v57
  %193 = vmatmul.f32.gmra.mxu0 %v35
  %v194 = vpop.f32.mrf.mxu0
  %v195 = vadd.f32 %v175, %v194
  %196 = vdwg.mxu0
  %197 = vmatpush.msra.mxu0 %v88
  %198 = vmatpush.msra.mxu0 %v87
  %199 = vmatpush.msra.mxu0 %v86
  %200 = vmatpush.msra.mxu0 %v85
  %201 = vmatpush.msra.mxu0 %v84
  %202 = vmatpush.msra.mxu0 %v83
  %203 = vmatpush.msra.mxu0 %v82
  %204 = vmatpush.msra.mxu0 %v81
  %205 = vmatpush.msra.mxu0 %v80
  %206 = vmatpush.msra.mxu0 %v79
  %207 = vmatpush.msra.mxu0 %v78
  %208 = vmatpush.msra.mxu0 %v77
  %209 = vmatpush.msra.mxu0 %v76
  %210 = vmatpush.msra.mxu0 %v75
  %211 = vmatpush.msra.mxu0 %v74
  %212 = vmatpush.msra.mxu0 %v73
  %213 = vmatmul.f32.gmra.mxu0 %v36
  %v214 = vpop.f32.mrf.mxu0
  %v215 = vadd.f32 %v195, %v214
  %216 = vdwg.mxu0
  %217 = vmatpush.msra.mxu0 %v104
  %218 = vmatpush.msra.mxu0 %v103
  %219 = vmatpush.msra.mxu0 %v102
  %220 = vmatpush.msra.mxu0 %v101
  %221 = vmatpush.msra.mxu0 %v100
  %222 = vmatpush.msra.mxu0 %v99
  %223 = vmatpush.msra.mxu0 %v98
  %224 = vmatpush.msra.mxu0 %v97
  %225 = vmatpush.msra.mxu0 %v96
  %226 = vmatpush.msra.mxu0 %v95
  %227 = vmatpush.msra.mxu0 %v94
  %228 = vmatpush.msra.mxu0 %v93
  %229 = vmatpush.msra.mxu0 %v92
  %230 = vmatpush.msra.mxu0 %v91
  %231 = vmatpush.msra.mxu0 %v90
  %232 = vmatpush.msra.mxu0 %v89
  %233 = vmatmul.f32.gmra.mxu0 %v37
  %v234 = vpop.f32.mrf.mxu0
  %v235 = vadd.f32 %v215, %v234
  %236 = vdwg.mxu0
  %237 = vmatpush.msra.mxu0 %v120
  %238 = vmatpush.msra.mxu0 %v119
  %239 = vmatpush.msra.mxu0 %v118
  %240 = vmatpush.msra.mxu0 %v117
  %241 = vmatpush.msra.mxu0 %v116
  %242 = vmatpush.msra.mxu0 %v115
  %243 = vmatpush.msra.mxu0 %v114
  %244 = vmatpush.msra.mxu0 %v113
  %245 = vmatpush.msra.mxu0 %v112
  %246 = vmatpush.msra.mxu0 %v111
  %247 = vmatpush.msra.mxu0 %v110
  %248 = vmatpush.msra.mxu0 %v109
  %249 = vmatpush.msra.mxu0 %v108
  %250 = vmatpush.msra.mxu0 %v107
  %251 = vmatpush.msra.mxu0 %v106
  %252 = vmatpush.msra.mxu0 %v105
  %253 = vmatmul.f32.gmra.mxu0 %v38
  %v254 = vpop.f32.mrf.mxu0
  %v255 = vadd.f32 %v235, %v254
  %256 = vdwg.mxu0
  %257 = vmatpush.msra.mxu0 %v136
  %258 = vmatpush.msra.mxu0 %v135
  %259 = vmatpush.msra.mxu0 %v134
  %260 = vmatpush.msra.mxu0 %v133
  %261 = vmatpush.msra.mxu0 %v132
  %262 = vmatpush.msra.mxu0 %v131
  %263 = vmatpush.msra.mxu0 %v130
  %264 = vmatpush.msra.mxu0 %v129
  %265 = vmatpush.msra.mxu0 %v128
  %266 = vmatpush.msra.mxu0 %v127
  %267 = vmatpush.msra.mxu0 %v126
  %268 = vmatpush.msra.mxu0 %v125
  %269 = vmatpush.msra.mxu0 %v124
  %270 = vmatpush.msra.mxu0 %v123
  %271 = vmatpush.msra.mxu0 %v122
  %272 = vmatpush.msra.mxu0 %v121
  %273 = vmatmul.f32.gmra.mxu0 %v39
  %v274 = vpop.f32.mrf.mxu0
  %v275 = vadd.f32 %v255, %v274
  %276 = vdwg.mxu0
  %277 = vmatpush.msra.mxu0 %v152
  %278 = vmatpush.msra.mxu0 %v151
  %279 = vmatpush.msra.mxu0 %v150
  %280 = vmatpush.msra.mxu0 %v149
  %281 = vmatpush.msra.mxu0 %v148
  %282 = vmatpush.msra.mxu0 %v147
  %283 = vmatpush.msra.mxu0 %v146
  %284 = vmatpush.msra.mxu0 %v145
  %285 = vmatpush.msra.mxu0 %v144
  %286 = vmatpush.msra.mxu0 %v143
  %287 = vmatpush.msra.mxu0 %v142
  %288 = vmatpush.msra.mxu0 %v141
  %289 = vmatpush.msra.mxu0 %v140
  %290 = vmatpush.msra.mxu0 %v139
  %291 = vmatpush.msra.mxu0 %v138
  %292 = vmatpush.msra.mxu0 %v137
  %293 = vmatmul.f32.gmra.mxu0 %v40
  %v294 = vpop.f32.mrf.mxu0
  %v295 = vadd.f32 %v275, %v294
  %296 = vdwg.mxu0
  %v297 = vmax.f32 %v295, 0.0
  %v298 = vld [vmem:[%s3] sm:$0xff]
  %v299 = vld [vmem:[%s3 + $0x8] sm:$0xff]
  %v300 = vld [vmem:[%s3 + $0x10] sm:$0xff]
  %v301 = vld [vmem:[%s3 + $0x18] sm:$0xff]
  %v302 = vld [vmem:[%s3 + $0x20] sm:$0xff]
  %v303 = vld [vmem:[%s3 + $0x28] sm:$0xff]
  %v304 = vld [vmem:[%s3 + $0x30] sm:$0xff]
  %v305 = vld [vmem:[%s3 + $0x38] sm:$0xff]
  %v306 = vld [vmem:[%s3 + $0x40] sm:$0xff]
  %v307 = vld [vmem:[%s3 + $0x48] sm:$0xff]
  %v308 = vld [vmem:[%s3 + $0x50] sm:$0xff]
  %v309 = vld [vmem:[%s3 + $0x58] sm:$0xff]
  %v310 = vld [vmem:[%s3 + $0x60] sm:$0xff]
  %v311 = vld [vmem:[%s3 + $0x68] sm:$0xff]
  %v312 = vld [vmem:[%s3 + $0x70] sm:$0xff]
  %v313 = vld [vmem:[%s3 + $0x78] sm:$0xff]
  %v314 = vld [vmem:[%s4] sm:$0x1]
  %v316 = vperm.slane %v314, 0
  %318 = vmatpush.msra.mxu0 %v313
  %319 = vmatpush.msra.mxu0 %v312
  %320 = vmatpush.msra.mxu0 %v311
  %321 = vmatpush.msra.mxu0 %v310
  %322 = vmatpush.msra.mxu0 %v309
  %323 = vmatpush.msra.mxu0 %v308
  %324 = vmatpush.msra.mxu0 %v307
  %325 = vmatpush.msra.mxu0 %v306
  %326 = vmatpush.msra.mxu0 %v305
  %327 = vmatpush.msra.mxu0 %v304
  %328 = vmatpush.msra.mxu0 %v303
  %329 = vmatpush.msra.mxu0 %v302
  %330 = vmatpush.msra.mxu0 %v301
  %331 = vmatpush.msra.mxu0 %v300
  %332 = vmatpush.msra.mxu0 %v299
  %333 = vmatpush.msra.mxu0 %v298
  %334 = vmatmul.f32.gmra.mxu0 %v297
  %v335 = vpop.f32.mrf.mxu0
  %v336 = vadd.f32 %v316, %v335
  %337 = vdwg.mxu0
  %v338 = vld [vmem:[%s5] sm:$0xff]
  %v339 = vld [vmem:[%s5 + $0x8] sm:$0xff]
  %v340 = vld [vmem:[%s5 + $0x10] sm:$0xff]
  %v341 = vld [vmem:[%s5 + $0x18] sm:$0xff]
  %v342 = vld [vmem:[%s5 + $0x20] sm:$0xff]
  %v343 = vld [vmem:[%s5 + $0x28] sm:$0xff]
  %v344 = vld [vmem:[%s5 + $0x30] sm:$0xff]
  %v345 = vld [vmem:[%s5 + $0x38] sm:$0xff]
  %v346 = vld [vmem:[%s5 + $0x40] sm:$0xff]
  %v347 = vld [vmem:[%s5 + $0x48] sm:$0xff]
  %v348 = vld [vmem:[%s5 + $0x50] sm:$0xff]
  %v349 = vld [vmem:[%s5 + $0x58] sm:$0xff]
  %v350 = vld [vmem:[%s5 + $0x60] sm:$0xff]
  %v351 = vld [vmem:[%s5 + $0x68] sm:$0xff]
  %v352 = vld [vmem:[%s5 + $0x70] sm:$0xff]
  %v353 = vld [vmem:[%s5 + $0x78] sm:$0xff]
  %v354 = vld [vmem:[%s6] sm:$0x1]
  %v356 = vperm.slane %v354, 0
  %358 = vmatpush.msra.mxu0 %v353
  %359 = vmatpush.msra.mxu0 %v352
  %360 = vmatpush.msra.mxu0 %v351
  %361 = vmatpush.msra.mxu0 %v350
  %362 = vmatpush.msra.mxu0 %v349
  %363 = vmatpush.msra.mxu0 %v348
  %364 = vmatpush.msra.mxu0 %v347
  %365 = vmatpush.msra.mxu0 %v346
  %366 = vmatpush.msra.mxu0 %v345
  %367 = vmatpush.msra.mxu0 %v344
  %368 = vmatpush.msra.mxu0 %v343
  %369 = vmatpush.msra.mxu0 %v342
  %370 = vmatpush.msra.mxu0 %v341
  %371 = vmatpush.msra.mxu0 %v340
  %372 = vmatpush.msra.mxu0 %v339
  %373 = vmatpush.msra.mxu0 %v338
  %374 = vmatmul.f32.gmra.mxu0 %v336
  %v375 = vpop.f32.mrf.mxu0
  %v376 = vadd.f32 %v356, %v375
  %377 = vdwg.mxu0
  %v378 = vmax.f32 %v376, 0.0
  %v379 = vld [vmem:[%s7] sm:$0xff]
  %v380 = vld [vmem:[%s7 + $0x8] sm:$0xff]
  %v381 = vld [vmem:[%s7 + $0x10] sm:$0xff]
  %v382 = vld [vmem:[%s7 + $0x18] sm:$0xff]
  %v383 = vld [vmem:[%s7 + $0x20] sm:$0xff]
  %v384 = vld [vmem:[%s7 + $0x28] sm:$0xff]
  %v385 = vld [vmem:[%s7 + $0x30] sm:$0xff]
  %v386 = vld [vmem:[%s7 + $0x38] sm:$0xff]
  %v387 = vld [vmem:[%s7 + $0x40] sm:$0xff]
  %v388 = vld [vmem:[%s7 + $0x48] sm:$0xff]
  %v389 = vld [vmem:[%s7 + $0x50] sm:$0xff]
  %v390 = vld [vmem:[%s7 + $0x58] sm:$0xff]
  %v391 = vld [vmem:[%s7 + $0x60] sm:$0xff]
  %v392 = vld [vmem:[%s7 + $0x68] sm:$0xff]
  %v393 = vld [vmem:[%s7 + $0x70] sm:$0xff]
  %v394 = vld [vmem:[%s7 + $0x78] sm:$0xff]
  %v395 = vld [vmem:[%s7 + $0x80] sm:$0xff]
  %v396 = vld [vmem:[%s7 + $0x88] sm:$0xff]
  %v397 = vld [vmem:[%s7 + $0x90] sm:$0xff]
  %v398 = vld [vmem:[%s7 + $0x98] sm:$0xff]
  %v399 = vld [vmem:[%s7 + $0xa0] sm:$0xff]
  %v400 = vld [vmem:[%s7 + $0xa8] sm:$0xff]
  %v401 = vld [vmem:[%s7 + $0xb0] sm:$0xff]
  %v402 = vld [vmem:[%s7 + $0xb8] sm:$0xff]
  %v403 = vld [vmem:[%s7 + $0xc0] sm:$0xff]
  %v404 = vld [vmem:[%s7 + $0xc8] sm:$0xff]
  %v405 = vld [vmem:[%s7 + $0xd0] sm:$0xff]
  %v406 = vld [vmem:[%s7 + $0xd8] sm:$0xff]
  %v407 = vld [vmem:[%s7 + $0xe0] sm:$0xff]
  %v408 = vld [vmem:[%s7 + $0xe8] sm:$0xff]
  %v409 = vld [vmem:[%s7 + $0xf0] sm:$0xff]
  %v410 = vld [vmem:[%s7 + $0xf8] sm:$0xff]
  %v411 = vld [vmem:[%s7 + $0x100] sm:$0xff]
  %v412 = vld [vmem:[%s7 + $0x108] sm:$0xff]
  %v413 = vld [vmem:[%s7 + $0x110] sm:$0xff]
  %v414 = vld [vmem:[%s7 + $0x118] sm:$0xff]
  %v415 = vld [vmem:[%s7 + $0x120] sm:$0xff]
  %v416 = vld [vmem:[%s7 + $0x128] sm:$0xff]
  %v417 = vld [vmem:[%s7 + $0x130] sm:$0xff]
  %v418 = vld [vmem:[%s7 + $0x138] sm:$0xff]
  %v419 = vld [vmem:[%s7 + $0x140] sm:$0xff]
  %v420 = vld [vmem:[%s7 + $0x148] sm:$0xff]
  %v421 = vld [vmem:[%s7 + $0x150] sm:$0xff]
  %v422 = vld [vmem:[%s7 + $0x158] sm:$0xff]
  %v423 = vld [vmem:[%s7 + $0x160] sm:$0xff]
  %v424 = vld [vmem:[%s7 + $0x168] sm:$0xff]
  %v425 = vld [vmem:[%s7 + $0x170] sm:$0xff]
  %v426 = vld [vmem:[%s7 + $0x178] sm:$0xff]
  %v427 = vld [vmem:[%s7 + $0x180] sm:$0xff]
  %v428 = vld [vmem:[%s7 + $0x188] sm:$0xff]
  %v429 = vld [vmem:[%s7 + $0x190] sm:$0xff]
  %v430 = vld [vmem:[%s7 + $0x198] sm:$0xff]
  %v431 = vld [vmem:[%s7 + $0x1a0] sm:$0xff]
  %v432 = vld [vmem:[%s7 + $0x1a8] sm:$0xff]
  %v433 = vld [vmem:[%s7 + $0x1b0] sm:$0xff]
  %v434 = vld [vmem:[%s7 + $0x1b8] sm:$0xff]
  %v435 = vld [vmem:[%s7 + $0x1c0] sm:$0xff]
  %v436 = vld [vmem:[%s7 + $0x1c8] sm:$0xff]
  %v437 = vld [vmem:[%s7 + $0x1d0] sm:$0xff]
  %v438 = vld [vmem:[%s7 + $0x1d8] sm:$0xff]
  %v439 = vld [vmem:[%s7 + $0x1e0] sm:$0xff]
  %v440 = vld [vmem:[%s7 + $0x1e8] sm:$0xff]
  %v441 = vld [vmem:[%s7 + $0x1f0] sm:$0xff]
  %v442 = vld [vmem:[%s7 + $0x1f8] sm:$0xff]
  %v443 = vld [vmem:[%s7 + $0x200] sm:$0xff]
  %v444 = vld [vmem:[%s7 + $0x208] sm:$0xff]
  %v445 = vld [vmem:[%s7 + $0x210] sm:$0xff]
  %v446 = vld [vmem:[%s7 + $0x218] sm:$0xff]
  %v447 = vld [vmem:[%s7 + $0x220] sm:$0xff]
  %v448 = vld [vmem:[%s7 + $0x228] sm:$0xff]
  %v449 = vld [vmem:[%s7 + $0x230] sm:$0xff]
  %v450 = vld [vmem:[%s7 + $0x238] sm:$0xff]
  %v451 = vld [vmem:[%s7 + $0x240] sm:$0xff]
  %v452 = vld [vmem:[%s7 + $0x248] sm:$0xff]
  %v453 = vld [vmem:[%s7 + $0x250] sm:$0xff]
  %v454 = vld [vmem:[%s7 + $0x258] sm:$0xff]
  %v455 = vld [vmem:[%s7 + $0x260] sm:$0xff]
  %v456 = vld [vmem:[%s7 + $0x268] sm:$0xff]
  %v457 = vld [vmem:[%s7 + $0x270] sm:$0xff]
  %v458 = vld [vmem:[%s7 + $0x278] sm:$0xff]
  %v459 = vld [vmem:[%s7 + $0x280] sm:$0xff]
  %v460 = vld [vmem:[%s7 + $0x288] sm:$0xff]
  %v461 = vld [vmem:[%s7 + $0x290] sm:$0xff]
  %v462 = vld [vmem:[%s7 + $0x298] sm:$0xff]
  %v463 = vld [vmem:[%s7 + $0x2a0] sm:$0xff]
  %v464 = vld [vmem:[%s7 + $0x2a8] sm:$0xff]
  %v465 = vld [vmem:[%s7 + $0x2b0] sm:$0xff]
  %v466 = vld [vmem:[%s7 + $0x2b8] sm:$0xff]
  %v467 = vld [vmem:[%s7 + $0x2c0] sm:$0xff]
  %v468 = vld [vmem:[%s7 + $0x2c8] sm:$0xff]
  %v469 = vld [vmem:[%s7 + $0x2d0] sm:$0xff]
  %v470 = vld [vmem:[%s7 + $0x2d8] sm:$0xff]
  %v471 = vld [vmem:[%s7 + $0x2e0] sm:$0xff]
  %v472 = vld [vmem:[%s7 + $0x2e8] sm:$0xff]
  %v473 = vld [vmem:[%s7 + $0x2f0] sm:$0xff]
  %v474 = vld [vmem:[%s7 + $0x2f8] sm:$0xff]
  %v475 = vld [vmem:[%s7 + $0x300] sm:$0xff]
  %v476 = vld [vmem:[%s7 + $0x308] sm:$0xff]
  %v477 = vld [vmem:[%s7 + $0x310] sm:$0xff]
  %v478 = vld [vmem:[%s7 + $0x318] sm:$0xff]
  %v479 = vld [vmem:[%s7 + $0x320] sm:$0xff]
  %v480 = vld [vmem:[%s7 + $0x328] sm:$0xff]
  %v481 = vld [vmem:[%s7 + $0x330] sm:$0xff]
  %v482 = vld [vmem:[%s7 + $0x338] sm:$0xff]
  %v483 = vld [vmem:[%s7 + $0x340] sm:$0xff]
  %v484 = vld [vmem:[%s7 + $0x348] sm:$0xff]
  %v485 = vld [vmem:[%s7 + $0x350] sm:$0xff]
  %v486 = vld [vmem:[%s7 + $0x358] sm:$0xff]
  %v487 = vld [vmem:[%s7 + $0x360] sm:$0xff]
  %v488 = vld [vmem:[%s7 + $0x368] sm:$0xff]
  %v489 = vld [vmem:[%s7 + $0x370] sm:$0xff]
  %v490 = vld [vmem:[%s7 + $0x378] sm:$0xff]
  %v491 = vld [vmem:[%s8] sm:$0xff]
  %v493 = vperm.slane %v491, 0
  %v494 = vperm.slane %v491, 1
  %v495 = vperm.slane %v491, 2
  %v496 = vperm.slane %v491, 3
  %v497 = vperm.slane %v491, 4
  %v498 = vperm.slane %v491, 5
  %v499 = vperm.slane %v491, 6
  %507 = vmatpush.msra.mxu0 %v484
  %508 = vmatpush.msra.mxu0 %v477
  %509 = vmatpush.msra.mxu0 %v470
  %510 = vmatpush.msra.mxu0 %v463
  %511 = vmatpush.msra.mxu0 %v456
  %512 = vmatpush.msra.mxu0 %v449
  %513 = vmatpush.msra.mxu0 %v442
  %514 = vmatpush.msra.mxu0 %v435
  %515 = vmatpush.msra.mxu0 %v428
  %516 = vmatpush.msra.mxu0 %v421
  %517 = vmatpush.msra.mxu0 %v414
  %518 = vmatpush.msra.mxu0 %v407
  %519 = vmatpush.msra.mxu0 %v400
  %520 = vmatpush.msra.mxu0 %v393
  %521 = vmatpush.msra.mxu0 %v386
  %522 = vmatpush.msra.mxu0 %v379
  %523 = vmatmul.f32.gmra.mxu0 %v378
  %v524 = vpop.f32.mrf.mxu0
  %v525 = vadd.f32 %v493, %v524
  %526 = vdwg.mxu0
  %527 = vmatpush.msra.mxu0 %v485
  %528 = vmatpush.msra.mxu0 %v478
  %529 = vmatpush.msra.mxu0 %v471
  %530 = vmatpush.msra.mxu0 %v464
  %531 = vmatpush.msra.mxu0 %v457
  %532 = vmatpush.msra.mxu0 %v450
  %533 = vmatpush.msra.mxu0 %v443
  %534 = vmatpush.msra.mxu0 %v436
  %535 = vmatpush.msra.mxu0 %v429
  %536 = vmatpush.msra.mxu0 %v422
  %537 = vmatpush.msra.mxu0 %v415
  %538 = vmatpush.msra.mxu0 %v408
  %539 = vmatpush.msra.mxu0 %v401
  %540 = vmatpush.msra.mxu0 %v394
  %541 = vmatpush.msra.mxu0 %v387
  %542 = vmatpush.msra.mxu0 %v380
  %543 = vmatmul.f32.gmra.mxu0 %v378
  %v544 = vpop.f32.mrf.mxu0
  %v545 = vadd.f32 %v494, %v544
  %546 = vdwg.mxu0
  %547 = vmatpush.msra.mxu0 %v486
  %548 = vmatpush.msra.mxu0 %v479
  %549 = vmatpush.msra.mxu0 %v472
  %550 = vmatpush.msra.mxu0 %v465
  %551 = vmatpush.msra.mxu0 %v458
  %552 = vmatpush.msra.mxu0 %v451
  %553 = vmatpush.msra.mxu0 %v444
  %554 = vmatpush.msra.mxu0 %v437
  %555 = vmatpush.msra.mxu0 %v430
  %556 = vmatpush.msra.mxu0 %v423
  %557 = vmatpush.msra.mxu0 %v416
  %558 = vmatpush.msra.mxu0 %v409
  %559 = vmatpush.msra.mxu0 %v402
  %560 = vmatpush.msra.mxu0 %v395
  %561 = vmatpush.msra.mxu0 %v388
  %562 = vmatpush.msra.mxu0 %v381
  %563 = vmatmul.f32.gmra.mxu0 %v378
  %v564 = vpop.f32.mrf.mxu0
  %v565 = vadd.f32 %v495, %v564
  %566 = vdwg.mxu0
  %567 = vmatpush.msra.mxu0 %v487
  %568 = vmatpush.msra.mxu0 %v480
  %569 = vmatpush.msra.mxu0 %v473
  %570 = vmatpush.msra.mxu0 %v466
  %571 = vmatpush.msra.mxu0 %v459
  %572 = vmatpush.msra.mxu0 %v452
  %573 = vmatpush.msra.mxu0 %v445
  %574 = vmatpush.msra.mxu0 %v438
  %575 = vmatpush.msra.mxu0 %v431
  %576 = vmatpush.msra.mxu0 %v424
  %577 = vmatpush.msra.mxu0 %v417
  %578 = vmatpush.msra.mxu0 %v410
  %579 = vmatpush.msra.mxu0 %v403
  %580 = vmatpush.msra.mxu0 %v396
  %581 = vmatpush.msra.mxu0 %v389
  %582 = vmatpush.msra.mxu0 %v382
  %583 = vmatmul.f32.gmra.mxu0 %v378
  %v584 = vpop.f32.mrf.mxu0
  %v585 = vadd.f32 %v496, %v584
  %586 = vdwg.mxu0
  %587 = vmatpush.msra.mxu0 %v488
  %588 = vmatpush.msra.mxu0 %v481
  %589 = vmatpush.msra.mxu0 %v474
  %590 = vmatpush.msra.mxu0 %v467
  %591 = vmatpush.msra.mxu0 %v460
  %592 = vmatpush.msra.mxu0 %v453
  %593 = vmatpush.msra.mxu0 %v446
  %594 = vmatpush.msra.mxu0 %v439
  %595 = vmatpush.msra.mxu0 %v432
  %596 = vmatpush.msra.mxu0 %v425
  %597 = vmatpush.msra.mxu0 %v418
  %598 = vmatpush.msra.mxu0 %v411
  %599 = vmatpush.msra.mxu0 %v404
  %600 = vmatpush.msra.mxu0 %v397
  %601 = vmatpush.msra.mxu0 %v390
  %602 = vmatpush.msra.mxu0 %v383
  %603 = vmatmul.f32.gmra.mxu0 %v378
  %v604 = vpop.f32.mrf.mxu0
  %v605 = vadd.f32 %v497, %v604
  %606 = vdwg.mxu0
  %607 = vmatpush.msra.mxu0 %v489
  %608 = vmatpush.msra.mxu0 %v482
  %609 = vmatpush.msra.mxu0 %v475
  %610 = vmatpush.msra.mxu0 %v468
  %611 = vmatpush.msra.mxu0 %v461
  %612 = vmatpush.msra.mxu0 %v454
  %613 = vmatpush.msra.mxu0 %v447
  %614 = vmatpush.msra.mxu0 %v440
  %615 = vmatpush.msra.mxu0 %v433
  %616 = vmatpush.msra.mxu0 %v426
  %617 = vmatpush.msra.mxu0 %v419
  %618 = vmatpush.msra.mxu0 %v412
  %619 = vmatpush.msra.mxu0 %v405
  %620 = vmatpush.msra.mxu0 %v398
  %621 = vmatpush.msra.mxu0 %v391
  %622 = vmatpush.msra.mxu0 %v384
  %623 = vmatmul.f32.gmra.mxu0 %v378
  %v624 = vpop.f32.mrf.mxu0
  %v625 = vadd.f32 %v498, %v624
  %626 = vdwg.mxu0
  %627 = vmatpush.msra.mxu0 %v490
  %628 = vmatpush.msra.mxu0 %v483
  %629 = vmatpush.msra.mxu0 %v476
  %630 = vmatpush.msra.mxu0 %v469
  %631 = vmatpush.msra.mxu0 %v462
  %632 = vmatpush.msra.mxu0 %v455
  %633 = vmatpush.msra.mxu0 %v448
  %634 = vmatpush.msra.mxu0 %v441
  %635 = vmatpush.msra.mxu0 %v434
  %636 = vmatpush.msra.mxu0 %v427
  %637 = vmatpush.msra.mxu0 %v420
  %638 = vmatpush.msra.mxu0 %v413
  %639 = vmatpush.msra.mxu0 %v406
  %640 = vmatpush.msra.mxu0 %v399
  %641 = vmatpush.msra.mxu0 %v392
  %642 = vmatpush.msra.mxu0 %v385
  %643 = vmatmul.f32.gmra.mxu0 %v378
  %v644 = vpop.f32.mrf.mxu0
  %v645 = vadd.f32 %v499, %v644
  %646 = vdwg.mxu0
  %v647 = vxor.u32 %v525, 2147483648
  %v648 = vxor.u32 %v545, 2147483648
  %v649 = vxor.u32 %v565, 2147483648
  %v650 = vxor.u32 %v585, 2147483648
  %v651 = vxor.u32 %v605, 2147483648
  %v652 = vxor.u32 %v625, 2147483648
  %v653 = vxor.u32 %v645, 2147483648
  %v654 = vmul.f32 %v647, 1.442695
  %v655 = vpow.pop %v654
  %v656 = vmul.f32 %v648, 1.442695
  %v657 = vpow.pop %v656
  %v658 = vmul.f32 %v649, 1.442695
  %v659 = vpow.pop %v658
  %v660 = vmul.f32 %v650, 1.442695
  %v661 = vpow.pop %v660
  %v662 = vmul.f32 %v651, 1.442695
  %v663 = vpow.pop %v662
  %v664 = vmul.f32 %v652, 1.442695
  %v665 = vpow.pop %v664
  %v666 = vmul.f32 %v653, 1.442695
  %v667 = vpow.pop %v666
  %v668 = vadd.f32 %v655, 1.0
  %v669 = vadd.f32 %v657, 1.0
  %v670 = vadd.f32 %v659, 1.0
  %v671 = vadd.f32 %v661, 1.0
  %v672 = vadd.f32 %v663, 1.0
  %v673 = vadd.f32 %v665, 1.0
  %v674 = vadd.f32 %v667, 1.0
  %v675 = vrcp.pop %v668
  %v676 = vmul.f32 %v668, %v675
  %v677 = vsub.f32 1.0, %v676
  %v678 = vmul.f32 %v675, %v677
  %v679 = vadd.f32 %v675, %v678
  %vm680 = vweird.f32 %v668
  %vm681 = vweird.f32 %v675
  %vm682 = vmor %vm680, %vm681
  %v683 = vsel %vm682, %v675, %v679
  %v684 = vand.u32 2147483647, %v668
  %vm685 = vcmp.eq.f32.partialorder %v684, 8.507059e+37
  %v686 = vand.u32 %v668, 2147483648
  %v687 = vor.u32 1.1754944e-38, %v686
  %v688 = vsel %vm685, %v687, %v683
  %v689 = vmul.f32 1.0, %v688
  %v690 = vrcp.pop %v669
  %v691 = vmul.f32 %v669, %v690
  %v692 = vsub.f32 1.0, %v691
  %v693 = vmul.f32 %v690, %v692
  %v694 = vadd.f32 %v690, %v693
  %vm695 = vweird.f32 %v669
  %vm696 = vweird.f32 %v690
  %vm697 = vmor %vm695, %vm696
  %v698 = vsel %vm697, %v690, %v694
  %v699 = vand.u32 2147483647, %v669
  %vm700 = vcmp.eq.f32.partialorder %v699, 8.507059e+37
  %v701 = vand.u32 %v669, 2147483648
  %v702 = vor.u32 1.1754944e-38, %v701
  %v703 = vsel %vm700, %v702, %v698
  %v704 = vmul.f32 1.0, %v703
  %v705 = vrcp.pop %v670
  %v706 = vmul.f32 %v670, %v705
  %v707 = vsub.f32 1.0, %v706
  %v708 = vmul.f32 %v705, %v707
  %v709 = vadd.f32 %v705, %v708
  %vm710 = vweird.f32 %v670
  %vm711 = vweird.f32 %v705
  %vm712 = vmor %vm710, %vm711
  %v713 = vsel %vm712, %v705, %v709
  %v714 = vand.u32 2147483647, %v670
  %vm715 = vcmp.eq.f32.partialorder %v714, 8.507059e+37
  %v716 = vand.u32 %v670, 2147483648
  %v717 = vor.u32 1.1754944e-38, %v716
  %v718 = vsel %vm715, %v717, %v713
  %v719 = vmul.f32 1.0, %v718
  %v720 = vrcp.pop %v671
  %v721 = vmul.f32 %v671, %v720
  %v722 = vsub.f32 1.0, %v721
  %v723 = vmul.f32 %v720, %v722
  %v724 = vadd.f32 %v720, %v723
  %vm725 = vweird.f32 %v671
  %vm726 = vweird.f32 %v720
  %vm727 = vmor %vm725, %vm726
  %v728 = vsel %vm727, %v720, %v724
  %v729 = vand.u32 2147483647, %v671
  %vm730 = vcmp.eq.f32.partialorder %v729, 8.507059e+37
  %v731 = vand.u32 %v671, 2147483648
  %v732 = vor.u32 1.1754944e-38, %v731
  %v733 = vsel %vm730, %v732, %v728
  %v734 = vmul.f32 1.0, %v733
  %v735 = vrcp.pop %v672
  %v736 = vmul.f32 %v672, %v735
  %v737 = vsub.f32 1.0, %v736
  %v738 = vmul.f32 %v735, %v737
  %v739 = vadd.f32 %v735, %v738
  %vm740 = vweird.f32 %v672
  %vm741 = vweird.f32 %v735
  %vm742 = vmor %vm740, %vm741
  %v743 = vsel %vm742, %v735, %v739
  %v744 = vand.u32 2147483647, %v672
  %vm745 = vcmp.eq.f32.partialorder %v744, 8.507059e+37
  %v746 = vand.u32 %v672, 2147483648
  %v747 = vor.u32 1.1754944e-38, %v746
  %v748 = vsel %vm745, %v747, %v743
  %v749 = vmul.f32 1.0, %v748
  %v750 = vrcp.pop %v673
  %v751 = vmul.f32 %v673, %v750
  %v752 = vsub.f32 1.0, %v751
  %v753 = vmul.f32 %v750, %v752
  %v754 = vadd.f32 %v750, %v753
  %vm755 = vweird.f32 %v673
  %vm756 = vweird.f32 %v750
  %vm757 = vmor %vm755, %vm756
  %v758 = vsel %vm757, %v750, %v754
  %v759 = vand.u32 2147483647, %v673
  %vm760 = vcmp.eq.f32.partialorder %v759, 8.507059e+37
  %v761 = vand.u32 %v673, 2147483648
  %v762 = vor.u32 1.1754944e-38, %v761
  %v763 = vsel %vm760, %v762, %v758
  %v764 = vmul.f32 1.0, %v763
  %v765 = vrcp.pop %v674
  %v766 = vmul.f32 %v674, %v765
  %v767 = vsub.f32 1.0, %v766
  %v768 = vmul.f32 %v765, %v767
  %v769 = vadd.f32 %v765, %v768
  %vm770 = vweird.f32 %v674
  %vm771 = vweird.f32 %v765
  %vm772 = vmor %vm770, %vm771
  %v773 = vsel %vm772, %v765, %v769
  %v774 = vand.u32 2147483647, %v674
  %vm775 = vcmp.eq.f32.partialorder %v774, 8.507059e+37
  %v776 = vand.u32 %v674, 2147483648
  %v777 = vor.u32 1.1754944e-38, %v776
  %v778 = vsel %vm775, %v777, %v773
  %v779 = vmul.f32 1.0, %v778
  %780 = vst [vmem:[%s9] sm:$0xff] %v689
  %781 = vst [vmem:[%s9 + $0x8] sm:$0xff] %v704
  %782 = vst [vmem:[%s9 + $0x10] sm:$0xff] %v719
  %783 = vst [vmem:[%s9 + $0x18] sm:$0xff] %v734
  %784 = vst [vmem:[%s9 + $0x20] sm:$0xff] %v749
  %785 = vst [vmem:[%s9 + $0x28] sm:$0xff] %v764
  %786 = vst [vmem:[%s9 + $0x30] sm:$0xff] %v779
  %v787 = vlaneseq
  %v788 = vshrl.u32 %v787, 7
  %s789 = smul.u32 0, 8
  %v790 = vstv %s789
  %v791 = vadd.s32 %v788, %v790
  %v792 = vlaneseq
  %v793 = vand.u32 %v792, 127
  %v794 = vadd.s32 %v793, 128
  %v795 = vadd.s32 %v793, 256
  %v796 = vadd.s32 %v793, 384
  %v797 = vadd.s32 %v793, 512
  %v798 = vadd.s32 %v793, 640
  %v799 = vadd.s32 %v793, 768
  %vm800 = vcmp.lt.s32.totalorder %v791, 2
  %vm801 = vcmp.lt.s32.totalorder %v793, 784
  %vm802 = vcmp.lt.s32.totalorder %v794, 784
  %vm803 = vcmp.lt.s32.totalorder %v795, 784
  %vm804 = vcmp.lt.s32.totalorder %v796, 784
  %vm805 = vcmp.lt.s32.totalorder %v797, 784
  %vm806 = vcmp.lt.s32.totalorder %v798, 784
  %vm807 = vcmp.lt.s32.totalorder %v799, 784
  %v808 = vsel %vm800, 1, 0
  %vm809 = vcmp.eq.s32.totalorder %v808, 1
  %v810 = vsel %vm801, 1, 0
  %v811 = vsel %vm802, 1, 0
  %v812 = vsel %vm803, 1, 0
  %v813 = vsel %vm804, 1, 0
  %v814 = vsel %vm805, 1, 0
  %v815 = vsel %vm806, 1, 0
  %v816 = vsel %vm807, 1, 0
  %vm817 = vcmp.eq.s32.totalorder %v810, 1
  %vm818 = vcmp.eq.s32.totalorder %v811, 1
  %vm819 = vcmp.eq.s32.totalorder %v812, 1
  %vm820 = vcmp.eq.s32.totalorder %v813, 1
  %vm821 = vcmp.eq.s32.totalorder %v814, 1
  %vm822 = vcmp.eq.s32.totalorder %v815, 1
  %vm823 = vcmp.eq.s32.totalorder %v816, 1
  %vm824 = vmand %vm809, %vm817
  %vm825 = vmand %vm809, %vm818
  %vm826 = vmand %vm809, %vm819
  %vm827 = vmand %vm809, %vm820
  %vm828 = vmand %vm809, %vm821
  %vm829 = vmand %vm809, %vm822
  %vm830 = vmand %vm809, %vm823
  %v831 = vsub.f32 %v689, %v34
  %v832 = vsub.f32 %v704, %v35
  %v833 = vsub.f32 %v719, %v36
  %v834 = vsub.f32 %v734, %v37
  %v835 = vsub.f32 %v749, %v38
  %v836 = vsub.f32 %v764, %v39
  %v837 = vsub.f32 %v779, %v40
  %v838 = vmul.f32 %v831, %v831
  %v839 = vmul.f32 %v832, %v832
  %v840 = vmul.f32 %v833, %v833
  %v841 = vmul.f32 %v834, %v834
  %v842 = vmul.f32 %v835, %v835
  %v843 = vmul.f32 %v836, %v836
  %v844 = vmul.f32 %v837, %v837
  %v845 = vsel %vm824, %v838, 0.0
  %v846 = vsel %vm825, %v839, 0.0
  %v847 = vsel %vm826, %v840, 0.0
  %v848 = vsel %vm827, %v841, 0.0
  %v849 = vsel %vm828, %v842, 0.0
  %v850 = vsel %vm829, %v843, 0.0
  %v851 = vsel %vm830, %v844, 0.0
  %v852 = vadd.f32 %v845, %v846
  %v853 = vadd.f32 %v852, %v847
  %v854 = vadd.f32 %v853, %v848
  %v855 = vadd.f32 %v854, %v849
  %v856 = vadd.f32 %v855, %v850
  %v857 = vadd.f32 %v856, %v851
  %858 = vadd.xlane.f32.xlu0 %v857
  %v859 = vpop.xlane.xlu0 %858
  %v860 = vrot.slane %v859, 4
  %v861 = vadd.f32 %v859, %v860
  %v862 = vrot.slane %v861, 2
  %v863 = vadd.f32 %v861, %v862
  %v864 = vrot.slane %v863, 1
  %v865 = vadd.f32 %v863, %v864
  %s866 = vtos %v865
  %v867 = vstv %s866
  %868 = vst [vmem:[%s10] sm:$0x1] %v867
  // Predicated region
  $region38: #{net_forward.1} parent=0 // pred_check
    _
  $region39: #{net_forward.1} parent=0 // pred_check_branch
    %870 = sbr.rel (0) target = $region41
  $region40: #{net_forward.1} parent=0 // pred_region
    _
  $region41: #{net_forward.1} parent=0 // pred_fallthru
    _
  // Predicated region
  $region42: #{net_forward.1} parent=0 // pred_check
    _
  $region43: #{net_forward.1} parent=0 // pred_check_branch
    %872 = sbr.rel (0) target = $region45
  $region44: #{net_forward.1} parent=0 // pred_region
    _
  $region45: #{net_forward.1} parent=0 // pred_fallthru
    _
  // Predicated region
  $region46: #{net_forward.1} parent=0 // pred_check
    _
  $region47: #{net_forward.1} parent=0 // pred_check_branch
    %874 = sbr.rel (0) target = $region49
  $region48: #{net_forward.1} parent=0 // pred_region
    _
  $region49: #{net_forward.1} parent=0 // pred_fallthru
    _
  // Predicated region
  $region50: #{net_forward.1} parent=0 // pred_check
    _
  $region51: #{net_forward.1} parent=0 // pred_check_branch
    %876 = sbr.rel (0) target = $region53
  $region52: #{net_forward.1} parent=0 // pred_region
    _
  $region53: #{net_forward.1} parent=0 // pred_fallthru
    _

</llo_original>
